<compile_context>
chip_gen: v5e
topology: v5e:2x2
jax: 0.10.0
libtpu: 0.0.40
codegen_flags: <defaults>
</compile_context>

<pallas_src>
import jax
import jax.numpy as jnp
from jax.experimental import pallas as pl
from jax.experimental.pallas import tpu as pltpu


def _choose_tiles(R: int, L: int, itemsize: int):
    """Pick (row_tile, l_tile) so one input tile is ~<= 1 MiB (double-buffered)."""
    target = 1 << 20  # ~1 MiB per input tile
    # Row tile: full R when small (equal-to-full-dim satisfies BlockSpec rules),
    # otherwise a multiple of 128 so the (2, TR) output store stays lane-dense
    # and sub-32-bit inputs stay sublane-packed.
    tr = R if R <= 512 else 512
    if tr * L * itemsize <= target:
        return tr, L
    # Tile the reduction axis in lane-aligned chunks; the tail is masked in-kernel.
    tl = max(128, ((target // (tr * itemsize)) // 128) * 128)
    if tl >= L:
        return tr, L
    return tr, tl


def _make_kernel(L: int, t_l: int, col_mask: bool):
    inv_l = 1.0 / float(L)

    def kernel(x_ref, out_ref, mx_acc, sum_acc):
        k = pl.program_id(1)

        @pl.when(k == 0)
        def _init():
            mx_acc[...] = jnp.full_like(mx_acc, -jnp.inf)
            sum_acc[...] = jnp.zeros_like(sum_acc)

        # (TR, tL) tile; accumulate in float32 regardless of input dtype.
        x = x_ref[...].astype(jnp.float32)
        if col_mask:
            col = jax.lax.broadcasted_iota(jnp.int32, x.shape, 1) + k * t_l
            valid = col < L
            x_max = jnp.where(valid, x, -jnp.inf)
            x_sum = jnp.where(valid, x, 0.0)
        else:
            x_max = x
            x_sum = x

        mx_acc[...] = jnp.maximum(mx_acc[...], jnp.max(x_max, axis=-1, keepdims=True))
        sum_acc[...] = sum_acc[...] + jnp.sum(x_sum, axis=-1, keepdims=True)

        @pl.when(k == pl.num_programs(1) - 1)
        def _finalize():
            # (TR, 2): col 0 = max, col 1 = mean; transpose once -> lane-dense (2, TR)
            # and do a single full-tile store.
            res = jnp.concatenate([mx_acc[...], sum_acc[...] * inv_l], axis=1)
            out_ref[...] = jnp.transpose(res, (1, 0)).astype(out_ref.dtype)

    return kernel


def adaptive_concat_pool1d(x: jax.Array) -> jax.Array:
    """x: (N, C, L) -> (N, 2*C, 1), matching AdaptiveConcatPool1d.forward."""
    N, C, L = x.shape
    R = N * C
    itemsize = jnp.dtype(x.dtype).itemsize

    x2 = x.reshape(R, L)  # free row-major reshape
    TR, tL = _choose_tiles(R, L, itemsize)
    n_r = pl.cdiv(R, TR)
    n_l = pl.cdiv(L, tL)
    col_mask = (L % tL) != 0

    kernel = _make_kernel(L, tL, col_mask)

    tile_bytes = TR * tL * itemsize
    vmem_limit = int(min(100 * 1024 * 1024, max(16 * 1024 * 1024, 6 * tile_bytes)))

    cost = pl.CostEstimate(
        flops=2 * R * L,  # one compare + one add per element
        transcendentals=0,
        bytes_accessed=R * L * itemsize + 2 * R * itemsize,
    )

    out2 = pl.pallas_call(
        kernel,
        out_shape=jax.ShapeDtypeStruct((2, R), x.dtype),
        grid_spec=pltpu.PrefetchScalarGridSpec(
            num_scalar_prefetch=0,
            grid=(n_r, n_l),  # rows parallel (leading), reduction last
            in_specs=[pl.BlockSpec((TR, tL), lambda i, k: (i, k))],
            out_specs=pl.BlockSpec((2, TR), lambda i, k: (0, i)),
            scratch_shapes=[
                pltpu.VMEM((TR, 1), jnp.float32),  # running max
                pltpu.VMEM((TR, 1), jnp.float32),  # running sum (f32 accumulation)
            ],
        ),
        compiler_params=pltpu.CompilerParams(
            dimension_semantics=("parallel", "arbitrary"),
            vmem_limit_bytes=vmem_limit,
        ),
        cost_estimate=cost,
    )(x2)

    # (2, R) -> PyTorch layout (N, 2*C, 1): max channels first, then mean channels.
    mx = out2[0].reshape(N, C, 1)
    av = out2[1].reshape(N, C, 1)
    return jnp.concatenate([mx, av], axis=1)


def _reference(x):
    return jnp.concatenate(
        [jnp.max(x, axis=-1, keepdims=True), jnp.mean(x, axis=-1, keepdims=True)],
        axis=1,
    )


if __name__ == "__main__":
    key = jax.random.PRNGKey(0)

    # Small deterministic example matching the module's expected input layout.
    N, C, L = 2, 4, 16
    x = jax.random.normal(key, (N, C, L), dtype=jnp.float32)
    out = jax.block_until_ready(adaptive_concat_pool1d(x))
    ref = _reference(x)
    assert out.shape == (N, 2 * C, 1), out.shape
    assert jnp.allclose(out, ref, atol=1e-6, rtol=1e-6), "mismatch vs reference (small)"

    # Second check that exercises the L-tiled accumulator path with a masked tail.
    key2 = jax.random.PRNGKey(1)
    N2, C2, L2 = 2, 64, 2100  # R = 128, tL = 2048 -> 2 reduction steps, tail masked
    x2 = jax.random.normal(key2, (N2, C2, L2), dtype=jnp.float32)
    out2 = jax.block_until_ready(adaptive_concat_pool1d(x2))
    ref2 = _reference(x2)
    assert out2.shape == (N2, 2 * C2, 1), out2.shape
    assert jnp.allclose(out2, ref2, atol=1e-5, rtol=1e-5), "mismatch vs reference (tiled L)"

    print("KERNEL_OK")
</pallas_src>

<mosaic_0001>
module attributes {stable_mosaic.version = 11 : i64} {
  func.func @kernel(%arg0: i32, %arg1: i32, %arg2: memref<8x16xf32, #tpu.memory_space<vmem>>, %arg3: memref<2x8xf32, #tpu.memory_space<vmem>>, %arg4: memref<8x1xf32, #tpu.memory_space<vmem>>, %arg5: memref<8x1xf32, #tpu.memory_space<vmem>>) attributes {dimension_semantics = [#tpu.dimension_semantics<parallel>, #tpu.dimension_semantics<arbitrary>], iteration_bounds = array<i64: 1, 1>, scalar_prefetch = 0 : i64, scratch_operands = 2 : i64, tpu.core_type = #tpu.core_type<tc>, window_params = [{transform_indices = @transform_0, window_bounds = array<i64: 8, 16>}, {transform_indices = @transform_1, window_bounds = array<i64: 2, 8>}]} {
    %c0_i32 = arith.constant 0 : i32
    %0 = arith.cmpi eq, %arg1, %c0_i32 : i32
    %1 = arith.extui %0 : i1 to i32
    %c0_i32_0 = arith.constant 0 : i32
    %2 = arith.cmpi ne, %1, %c0_i32_0 : i32
    scf.if %2 {
      %cst_13 = arith.constant 0xFF800000 : f32
      %17 = vector.broadcast %cst_13 : f32 to vector<8x1xf32>
      %c0_14 = arith.constant 0 : index
      %c0_15 = arith.constant 0 : index
      %18 = vector.load %arg4[%c0_14, %c0_15] : memref<8x1xf32, #tpu.memory_space<vmem>>, vector<8x1xf32>
      tpu.vector_store %arg4[%c0_14, %c0_15], %17 {strides = array<i32>} : memref<8x1xf32, #tpu.memory_space<vmem>>, vector<8x1xf32>,
      %cst_16 = arith.constant 0.000000e+00 : f32
      %19 = vector.broadcast %cst_16 : f32 to vector<8x1xf32>
      %c0_17 = arith.constant 0 : index
      %c0_18 = arith.constant 0 : index
      %20 = vector.load %arg5[%c0_17, %c0_18] : memref<8x1xf32, #tpu.memory_space<vmem>>, vector<8x1xf32>
      tpu.vector_store %arg5[%c0_17, %c0_18], %19 {strides = array<i32>} : memref<8x1xf32, #tpu.memory_space<vmem>>, vector<8x1xf32>,
    } else {
    }
    %c0 = arith.constant 0 : index
    %c0_1 = arith.constant 0 : index
    %3 = vector.load %arg2[%c0, %c0_1] : memref<8x16xf32, #tpu.memory_space<vmem>>, vector<8x16xf32>
    %c0_2 = arith.constant 0 : index
    %c0_3 = arith.constant 0 : index
    %4 = vector.load %arg4[%c0_2, %c0_3] : memref<8x1xf32, #tpu.memory_space<vmem>>, vector<8x1xf32>
    %cst = arith.constant dense<0xFF800000> : vector<8xf32>
    %5 = vector.multi_reduction <maximumf>, %3, %cst [1] : vector<8x16xf32> to vector<8xf32>
    %6 = vector.shape_cast %5 : vector<8xf32> to vector<8x1xf32>
    %7 = arith.maximumf %4, %6 : vector<8x1xf32>
    %c0_4 = arith.constant 0 : index
    %c0_5 = arith.constant 0 : index
    %8 = vector.load %arg4[%c0_4, %c0_5] : memref<8x1xf32, #tpu.memory_space<vmem>>, vector<8x1xf32>
    tpu.vector_store %arg4[%c0_4, %c0_5], %7 {strides = array<i32>} : memref<8x1xf32, #tpu.memory_space<vmem>>, vector<8x1xf32>,
    %c0_6 = arith.constant 0 : index
    %c0_7 = arith.constant 0 : index
    %9 = vector.load %arg5[%c0_6, %c0_7] : memref<8x1xf32, #tpu.memory_space<vmem>>, vector<8x1xf32>
    %cst_8 = arith.constant dense<0.000000e+00> : vector<8xf32>
    %10 = vector.multi_reduction <add>, %3, %cst_8 [1] : vector<8x16xf32> to vector<8xf32>
    %11 = vector.shape_cast %10 : vector<8xf32> to vector<8x1xf32>
    %12 = arith.addf %9, %11 : vector<8x1xf32>
    %c0_9 = arith.constant 0 : index
    %c0_10 = arith.constant 0 : index
    %13 = vector.load %arg5[%c0_9, %c0_10] : memref<8x1xf32, #tpu.memory_space<vmem>>, vector<8x1xf32>
    tpu.vector_store %arg5[%c0_9, %c0_10], %12 {strides = array<i32>} : memref<8x1xf32, #tpu.memory_space<vmem>>, vector<8x1xf32>,
    %c0_i32_11 = arith.constant 0 : i32
    %14 = arith.cmpi eq, %arg1, %c0_i32_11 : i32
    %15 = arith.extui %14 : i1 to i32
    %c0_i32_12 = arith.constant 0 : i32
    %16 = arith.cmpi ne, %15, %c0_i32_12 : i32
    scf.if %16 {
      %c0_13 = arith.constant 0 : index
      %c0_14 = arith.constant 0 : index
      %17 = vector.load %arg4[%c0_13, %c0_14] : memref<8x1xf32, #tpu.memory_space<vmem>>, vector<8x1xf32>
      %c0_15 = arith.constant 0 : index
      %c0_16 = arith.constant 0 : index
      %18 = vector.load %arg5[%c0_15, %c0_16] : memref<8x1xf32, #tpu.memory_space<vmem>>, vector<8x1xf32>
      %cst_17 = arith.constant 6.250000e-02 : f32
      %19 = vector.broadcast %cst_17 : f32 to vector<8x1xf32>
      %20 = arith.mulf %18, %19 : vector<8x1xf32>
      %21 = tpu.concatenate %17, %20 in 1 : vector<8x1xf32>, vector<8x1xf32> -> vector<8x2xf32>
      %22 = tpu.transpose %21, [1, 0] : vector<8x2xf32> -> vector<2x8xf32>
      %c0_18 = arith.constant 0 : index
      %c0_19 = arith.constant 0 : index
      %23 = vector.load %arg3[%c0_18, %c0_19] : memref<2x8xf32, #tpu.memory_space<vmem>>, vector<2x8xf32>
      tpu.vector_store %arg3[%c0_18, %c0_19], %22 {strides = array<i32>} : memref<2x8xf32, #tpu.memory_space<vmem>>, vector<2x8xf32>,
    } else {
    }
    return
  }
  func.func @transform_0(%arg0: i32, %arg1: i32) -> (i32, i32) {
    %c0_i32 = arith.constant 0 : i32
    return %arg0, %arg1 : i32, i32
  }
  func.func @transform_1(%arg0: i32, %arg1: i32) -> (i32, i32) {
    %c0_i32 = arith.constant 0 : i32
    %c0_i32_0 = arith.constant 0 : i32
    return %c0_i32, %arg0 : i32, i32
  }
}

</mosaic_0001>

<llo_original>
// kernel: tpu_custom_call.1
$region0: #{tpu_custom_call.1}
  #allocation0 [shape = 'u32[]', space=smem, size = 0x4, offset = 0x4, fixed_abs, tag = 'smem constant byte address 0x4 - core index']
  #allocation1 [shape = 'u32[72,128]{1,0:T(1,128)}', space=vmem, size = 0x9000, scoped, tag = 'internal scratch']
  #allocation2 [shape = 'f32[8,1]{1,0:T(8,128)}', space=vmem, size = 0x1000, scoped, tag = 'scratch operand']
  #allocation3 [shape = 'f32[8,1]{1,0:T(8,128)}', space=vmem, size = 0x1000, scoped, tag = 'scratch operand']
  %s0 = inlined_call_operand.hbm [shape: f32[8,16], index: 0, kind: input, shape index: {}]
  %s1 = inlined_call_operand.hbm [shape: f32[2,8], index: 1, kind: output, shape index: {}]
  %s2 = sld [smem:[#allocation0]]
  $region26: #{tpu_custom_call.1} parent=0
    _
  %s4 = ssub.s32 1, %s2
  %s5 = scalar_select 0, %s4, %s2
  $region1: #{tpu_custom_call.1} parent=0
    #allocation4 [shape = 'u8[4096]{0}', space=vmem, size = 0x1000, scoped, tag = 'input window, operand 0, single buffered']
    #allocation5 [shape = 's32[1]{0}', space=sflag, size = 0x4, scoped, tag = 'scoped memory for tpu_custom_call.1']
    #allocation6 [shape = 's32[1]{0}', space=sflag, size = 0x4, scoped, tag = 'scoped memory for tpu_custom_call.1']
    #allocation7 [shape = 'u8[1024]{0}', space=vmem, size = 0x400, scoped, tag = 'output window, operand 0, single buffered']
    %6 = vsyncpa [#allocation5], 0
    %7 = vsyncpa [#allocation6], 0
    // Predicated region
    $region2: #{tpu_custom_call.1} parent=1 // pred_check
      _
    $region3: #{tpu_custom_call.1} parent=1 // pred_check_branch
      %9 = sbr.rel (0) target = $region5
    $region4: #{tpu_custom_call.1} parent=1 // pred_region
      %11 = vsyncadd [#allocation5], 0
      %s13 = sshll.u32 %s0, 4
      %s14 = int_to_ptr.hbm [resolvable:$true] %s13
      %s15 = sshll.u32 [#allocation4], 4
      %s16 = int_to_ptr.vmem [resolvable:$true] %s15
      %18 = dma.hbm_to_vmem [thread:$0]  %s14, 128, %s16, [#allocation5]
    $region5: #{tpu_custom_call.1} parent=1 // pred_fallthru
      _
    // Predicated region
    $region6: #{tpu_custom_call.1} parent=1 // pred_check
      _
    $region7: #{tpu_custom_call.1} parent=1 // pred_check_branch
      %20 = sbr.rel (0) target = $region9
    $region8: #{tpu_custom_call.1} parent=1 // pred_region
      %22 = dma.done [#allocation5], 128
    $region9: #{tpu_custom_call.1} parent=1 // pred_fallthru
      _
    %p23 = scmp.eq.s32.totalorder 0, 0
    // Predicated region
    $region10: #{tpu_custom_call.1} parent=1 // pred_check
      %p24 = pneg %p23
    $region11: #{tpu_custom_call.1} parent=1 // pred_check_branch
      %26 = sbr.rel (%p24) target = $region13
    $region12: #{tpu_custom_call.1} parent=1 // pred_region
      %vm27 = vcmask 7168
      %28 = vst.msk [vmem:[#allocation2] sm:$0xff] %vm27, -inf
      %29 = vst.msk [vmem:[#allocation3] sm:$0xff] %vm27, 0.0
    $region13: #{tpu_custom_call.1} parent=1 // pred_fallthru
      _
    %v30 = vld [vmem:[#allocation4] sm:$0xff]
    %v31 = vld [vmem:[#allocation2] sm:$0xff]
    %vm32 = vcmask 130048
    %v33 = vsel %vm32, %v30, -inf
    %34 = vmax.xlane.f32.xlu0 %v33
    %v35 = vpop.xlane.xlu0 %34
    %v36 = vmax.f32 %v31, %v35
    %vm37 = vcmask 7168
    %38 = vst.msk [vmem:[#allocation2] sm:$0xff] %vm37, %v36
    %v39 = vld [vmem:[#allocation3] sm:$0xff]
    %v40 = vsel %vm32, %v30, 0.0
    %41 = vadd.xlane.f32.xlu0 %v40
    %v42 = vpop.xlane.xlu0 %41
    %v43 = vadd.f32 %v39, %v42
    %44 = vst.msk [vmem:[#allocation3] sm:$0xff] %vm37, %v43
    // Predicated region
    $region14: #{tpu_custom_call.1} parent=1 // pred_check
      %p45 = pneg %p23
    $region15: #{tpu_custom_call.1} parent=1 // pred_check_branch
      %47 = sbr.rel (%p45) target = $region17
    $region16: #{tpu_custom_call.1} parent=1 // pred_region
      %v48 = vld [vmem:[#allocation2] sm:$0xff]
      %v49 = vld [vmem:[#allocation3] sm:$0xff]
      %v50 = vmul.f32 %v49, 0.0625
      %52 = vrot.lane.b32.xlu0 %v50, 1
      %v53 = vpop.permute.xlu0 %52
      %v55 = vsel %vm37, %v48, %v53
      %56 = vxpose.xlu0.b32.start [1/16] %v55, 128
      %57 = vxpose.xlu0.b32.cont [2/16] 0.0, 128
      %58 = vxpose.xlu0.b32.cont [3/16] 0.0, 128
      %59 = vxpose.xlu0.b32.cont [4/16] 0.0, 128
      %60 = vxpose.xlu0.b32.cont [5/16] 0.0, 128
      %61 = vxpose.xlu0.b32.cont [6/16] 0.0, 128
      %62 = vxpose.xlu0.b32.cont [7/16] 0.0, 128
      %63 = vxpose.xlu0.b32.cont [8/16] 0.0, 128
      %64 = vxpose.xlu0.b32.cont [9/16] 0.0, 128
      %65 = vxpose.xlu0.b32.cont [10/16] 0.0, 128
      %66 = vxpose.xlu0.b32.cont [11/16] 0.0, 128
      %67 = vxpose.xlu0.b32.cont [12/16] 0.0, 128
      %68 = vxpose.xlu0.b32.cont [13/16] 0.0, 128
      %69 = vxpose.xlu0.b32.cont [14/16] 0.0, 128
      %70 = vxpose.xlu0.b32.cont [15/16] 0.0, 128
      %71 = vxpose.xlu0.b32.end [16/16] 0.0, 128
      %v72 = vpop.trf.xlu0
      %v73 = vpop.trf.xlu0
      %v74 = vpop.trf.xlu0
      %v75 = vpop.trf.xlu0
      %v76 = vpop.trf.xlu0
      %v77 = vpop.trf.xlu0
      %v78 = vpop.trf.xlu0
      %v79 = vpop.trf.xlu0
      %v80 = vpop.trf.xlu0
      %v81 = vpop.trf.xlu0
      %v82 = vpop.trf.xlu0
      %v83 = vpop.trf.xlu0
      %v84 = vpop.trf.xlu0
      %v85 = vpop.trf.xlu0
      %v86 = vpop.trf.xlu0
      %v87 = vpop.trf.xlu0
      %vm88 = vcmask 58368
      %89 = vst.msk [vmem:[#allocation7] sm:$0x3] %vm88, %v72
    $region17: #{tpu_custom_call.1} parent=1 // pred_fallthru
      _
    // Predicated region
    $region18: #{tpu_custom_call.1} parent=1 // pred_check
      _
    $region19: #{tpu_custom_call.1} parent=1 // pred_check_branch
      %91 = sbr.rel (0) target = $region21
    $region20: #{tpu_custom_call.1} parent=1 // pred_region
      %93 = vsyncadd [#allocation6], 0
      %s95 = sshll.u32 [#allocation7], 4
      %s96 = int_to_ptr.vmem [resolvable:$true] %s95
      %s97 = sshll.u32 %s1, 4
      %s98 = int_to_ptr.hbm [resolvable:$true] %s97
      %100 = dma.vmem_to_hbm [thread:$0]  %s96, 32, %s98, [#allocation6]
    $region21: #{tpu_custom_call.1} parent=1 // pred_fallthru
      _
    // Predicated region
    $region22: #{tpu_custom_call.1} parent=1 // pred_check
      _
    $region23: #{tpu_custom_call.1} parent=1 // pred_check_branch
      %102 = sbr.rel (0) target = $region25
    $region24: #{tpu_custom_call.1} parent=1 // pred_region
      %104 = dma.done [#allocation6], 32
    $region25: #{tpu_custom_call.1} parent=1 // pred_fallthru
      _
    %105 = vsyncpa [#allocation5], 1
    %106 = vsyncpa [#allocation6], 1

</llo_original>
